<compile_context>
chip_gen: v7x
topology: tpu7x:2x2x1
jax: 0.10.0
libtpu: 0.0.40
codegen_flags: <defaults>
</compile_context>

<pallas_src>
import jax
import jax.numpy as jnp
from jax import lax
from jax.experimental import pallas as pl
from jax.experimental.pallas import tpu as pltpu

NUM_CLASSES = 23

# Per grid step (double-buffered by the Pallas pipeline):
#   output block : NUM_CLASSES * tH * W * 4 bytes   x2
#   labels block :               tH * W * 4 bytes   x2
# Keep the working set conservative so it also fits v7x (64 MiB physical VMEM).
_TILE_VMEM_BUDGET_BYTES = 24 * 1024 * 1024
_VMEM_LIMIT_BYTES = 48 * 1024 * 1024


def _one_hot_kernel(labels_ref, out_ref):
    """One grid step: all NUM_CLASSES planes for a (tH, W) strip of rows.

    labels_ref: (tH, W) int32 target labels.
    out_ref:    (1, NUM_CLASSES, tH, W) float32 slab of the output.
    """
    labels = labels_ref[...]
    # target_image[target_image == -1] = 1  (runs once per tile, not per class)
    fixed = jnp.where(labels == jnp.int32(-1), jnp.int32(1), labels)
    # All class planes at once: plane c is (fixed == c).
    cls = lax.broadcasted_iota(jnp.int32, (NUM_CLASSES,) + fixed.shape, 0)
    out_ref[...] = (cls == fixed[None, :, :]).astype(jnp.float32)[None]


def _pick_tile_h(H, W):
    """Largest row-tile that fits the VMEM budget and satisfies layout rules."""
    bytes_per_row = (NUM_CLASSES + 1) * W * 4 * 2  # in+out, double-buffered
    cap = max(1, _TILE_VMEM_BUDGET_BYTES // bytes_per_row)
    if H <= cap:
        return H  # single step / small-image path
    # Need tH to be a multiple of 8 (sublane rule) AND divide H evenly.
    t = (cap // 8) * 8
    while t >= 8:
        if H % t == 0:
            return t
        t -= 8
    # No clean divisor found: fall back to a single full-height step.
    return H


def dummy_segmentation_forward(x, target_image):
    """Equivalent of DummySegmentationModel(target_image).forward(x).

    x is ignored (as in the PyTorch module); target_image is (H, W) integer.
    Returns (1, NUM_CLASSES, H, W) float32.
    """
    del x  # forward ignores its input, just like the PyTorch module
    H, W = target_image.shape
    labels = target_image.astype(jnp.int32)

    tile_h = _pick_tile_h(H, W)
    grid = (H // tile_h,)

    return pl.pallas_call(
        _one_hot_kernel,
        out_shape=jax.ShapeDtypeStruct((1, NUM_CLASSES, H, W), jnp.float32),
        grid_spec=pltpu.PrefetchScalarGridSpec(
            num_scalar_prefetch=0,
            grid=grid,
            in_specs=[
                pl.BlockSpec((tile_h, W), lambda i: (i, 0)),
            ],
            out_specs=pl.BlockSpec(
                (1, NUM_CLASSES, tile_h, W), lambda i: (0, 0, i, 0)
            ),
        ),
        compiler_params=pltpu.CompilerParams(
            dimension_semantics=("parallel",),
            vmem_limit_bytes=_VMEM_LIMIT_BYTES,
        ),
    )(labels)


if __name__ == "__main__":
    key = jax.random.PRNGKey(0)
    B, C_in, H, W = 2, 4, 16, 16

    # Deterministic target image with labels in [-1, NUM_CLASSES): include -1
    # entries to exercise the target_image[target_image == -1] = 1 path.
    k1, k2 = jax.random.split(key)
    target_image = jax.random.randint(
        k1, (H, W), minval=-1, maxval=NUM_CLASSES, dtype=jnp.int32
    )
    # Dummy network input (ignored by forward, kept for interface parity).
    x = jax.random.normal(k2, (B, C_in, H, W), dtype=jnp.float32)

    pred = dummy_segmentation_forward(x, target_image)
    pred = jax.block_until_ready(pred)

    # Sanity-check against a pure-JAX reference of the PyTorch semantics.
    fixed = jnp.where(target_image == -1, 1, target_image)
    ref = jax.nn.one_hot(fixed, NUM_CLASSES, dtype=jnp.float32)  # (H, W, C)
    ref = jnp.transpose(ref, (2, 0, 1))[None]                    # (1, C, H, W)

    assert pred.shape == (1, NUM_CLASSES, H, W), pred.shape
    assert pred.dtype == jnp.float32
    assert bool(jnp.all(pred == ref))

    print("KERNEL_OK")
</pallas_src>

<mosaic_0001>
module attributes {stable_mosaic.version = 11 : i64} {
  func.func @_one_hot_kernel(%arg0: i32, %arg1: memref<16x16xi32, #tpu.memory_space<vmem>>, %arg2: memref<1x23x16x16xf32, #tpu.memory_space<vmem>>) attributes {dimension_semantics = [#tpu.dimension_semantics<parallel>], iteration_bounds = array<i64: 1>, scalar_prefetch = 0 : i64, scratch_operands = 0 : i64, tpu.core_type = #tpu.core_type<tc>, window_params = [{transform_indices = @transform_0, window_bounds = array<i64: 16, 16>}, {transform_indices = @transform_1, window_bounds = array<i64: 1, 23, 16, 16>}]} {
    %c0 = arith.constant 0 : index
    %c0_0 = arith.constant 0 : index
    %0 = vector.load %arg1[%c0, %c0_0] : memref<16x16xi32, #tpu.memory_space<vmem>>, vector<16x16xi32>
    %c-1_i32 = arith.constant -1 : i32
    %1 = vector.broadcast %c-1_i32 : i32 to vector<16x16xi32>
    %2 = arith.cmpi eq, %0, %1 : vector<16x16xi32>
    %c1_i32 = arith.constant 1 : i32
    %3 = vector.broadcast %c1_i32 : i32 to vector<16x16xi32>
    %4 = arith.select %2, %3, %0 : vector<16x16xi1>, vector<16x16xi32>
    %5 = tpu.iota {dimensions = array<i32: 0>} : vector<23x16x16xi32>
    %6 = vector.shape_cast %4 : vector<16x16xi32> to vector<1x16x16xi32>
    %7 = vector.broadcast %6 : vector<1x16x16xi32> to vector<23x16x16xi32>
    %8 = arith.cmpi eq, %5, %7 : vector<23x16x16xi32>
    %9 = arith.extui %8 : vector<23x16x16xi1> to vector<23x16x16xi32>
    %10 = arith.sitofp %9 : vector<23x16x16xi32> to vector<23x16x16xf32>
    %11 = vector.shape_cast %10 : vector<23x16x16xf32> to vector<1x23x16x16xf32>
    %c0_1 = arith.constant 0 : index
    %c0_2 = arith.constant 0 : index
    %c0_3 = arith.constant 0 : index
    %c0_4 = arith.constant 0 : index
    %12 = vector.load %arg2[%c0_1, %c0_2, %c0_3, %c0_4] : memref<1x23x16x16xf32, #tpu.memory_space<vmem>>, vector<1x23x16x16xf32>
    tpu.vector_store %arg2[%c0_1, %c0_2, %c0_3, %c0_4], %11 {strides = array<i32>} : memref<1x23x16x16xf32, #tpu.memory_space<vmem>>, vector<1x23x16x16xf32>,
    return
  }
  func.func @transform_0(%arg0: i32) -> (i32, i32) {
    %c0_i32 = arith.constant 0 : i32
    %c0_i32_0 = arith.constant 0 : i32
    return %arg0, %c0_i32 : i32, i32
  }
  func.func @transform_1(%arg0: i32) -> (i32, i32, i32, i32) {
    %c0_i32 = arith.constant 0 : i32
    %c0_i32_0 = arith.constant 0 : i32
    %c0_i32_1 = arith.constant 0 : i32
    %c0_i32_2 = arith.constant 0 : i32
    return %c0_i32, %c0_i32_0, %arg0, %c0_i32_1 : i32, i32, i32, i32
  }
}

</mosaic_0001>

<llo_original>
// kernel: tpu_custom_call.1
$region0: #{tpu_custom_call.1}
  #allocation0 [shape = 'u32[]', space=smem, size = 0x4, offset = 0x4, fixed_abs, tag = 'smem constant byte address 0x4 - core index']
  #allocation1 [shape = 'u32[144,128]{1,0:T(1,128)}', space=vmem, size = 0x12000, scoped, tag = 'internal scratch']
  %s0 = inlined_call_operand.hbm [shape: s32[16,16], index: 0, kind: input, shape index: {}]
  %s1 = inlined_call_operand.vmem [shape: f32[1,23,16,16], index: 1, kind: output, shape index: {}]
  %s2 = sld [smem:[#allocation0]]
  $region18: #{tpu_custom_call.1} parent=0
    _
  %s4 = ssub.s32 1, %s2
  %s5 = scalar_select 0, %s4, %s2
  $region1: #{tpu_custom_call.1} parent=0
    #allocation2 [shape = 'u8[8192]{0}', space=vmem, size = 0x2000, scoped, tag = 'input window, operand 0, single buffered']
    #allocation3 [shape = 's32[1]{0}', space=sflag, size = 0x4, scoped, tag = 'scoped memory for tpu_custom_call.1']
    %6 = vsyncpa [#allocation3], 0
    // Predicated region
    $region2: #{tpu_custom_call.1} parent=1 // pred_check
      _
    $region3: #{tpu_custom_call.1} parent=1 // pred_check_branch
      %8 = sbr.rel (0) target = $region5
    $region4: #{tpu_custom_call.1} parent=1 // pred_region
      %s10 = ssub.s32 256, 256
      %11 = vsyncadd [#allocation3], %s10
      %s12 = sshll.u32 [#allocation2], 4
      %s13 = int_to_ptr.vmem [resolvable:$true] %s12
      %18 = dma.hbm_to_vmem [thread:$0]  %s0, 256, %s13, [#allocation3], 128, 128, 8
    $region5: #{tpu_custom_call.1} parent=1 // pred_fallthru
      _
    // Predicated region
    $region6: #{tpu_custom_call.1} parent=1 // pred_check
      _
    $region7: #{tpu_custom_call.1} parent=1 // pred_check_branch
      %20 = sbr.rel (0) target = $region9
    $region8: #{tpu_custom_call.1} parent=1 // pred_region
      %21 = dma.done [#allocation3], 256
    $region9: #{tpu_custom_call.1} parent=1 // pred_fallthru
      _
    %v22 = vld [vmem:[#allocation2] sm:$0xff]
    %v23 = vld [vmem:[#allocation2 + $0x8] sm:$0xff]
    %vm24 = vcmp.eq.s32.totalorder %v22, 4294967295
    %vm25 = vcmp.eq.s32.totalorder %v23, 4294967295
    %v26 = vsel %vm24, 1, %v22
    %v27 = vsel %vm25, 1, %v23
    %vm28 = vcmp.eq.s32.totalorder %v26, 0
    %vm29 = vcmp.eq.s32.totalorder %v27, 0
    %vm30 = vcmp.eq.s32.totalorder %v26, 1
    %vm31 = vcmp.eq.s32.totalorder %v27, 1
    %vm32 = vcmp.eq.s32.totalorder %v26, 2
    %vm33 = vcmp.eq.s32.totalorder %v27, 2
    %vm34 = vcmp.eq.s32.totalorder %v26, 3
    %vm35 = vcmp.eq.s32.totalorder %v27, 3
    %vm36 = vcmp.eq.s32.totalorder %v26, 4
    %vm37 = vcmp.eq.s32.totalorder %v27, 4
    %vm38 = vcmp.eq.s32.totalorder %v26, 5
    %vm39 = vcmp.eq.s32.totalorder %v27, 5
    %vm40 = vcmp.eq.s32.totalorder %v26, 6
    %vm41 = vcmp.eq.s32.totalorder %v27, 6
    %vm42 = vcmp.eq.s32.totalorder %v26, 7
    %vm43 = vcmp.eq.s32.totalorder %v27, 7
    %vm44 = vcmp.eq.s32.totalorder %v26, 8
    %vm45 = vcmp.eq.s32.totalorder %v27, 8
    %vm46 = vcmp.eq.s32.totalorder %v26, 9
    %vm47 = vcmp.eq.s32.totalorder %v27, 9
    %vm48 = vcmp.eq.s32.totalorder %v26, 10
    %vm49 = vcmp.eq.s32.totalorder %v27, 10
    %vm50 = vcmp.eq.s32.totalorder %v26, 11
    %vm51 = vcmp.eq.s32.totalorder %v27, 11
    %vm52 = vcmp.eq.s32.totalorder %v26, 12
    %vm53 = vcmp.eq.s32.totalorder %v27, 12
    %vm54 = vcmp.eq.s32.totalorder %v26, 13
    %vm55 = vcmp.eq.s32.totalorder %v27, 13
    %vm56 = vcmp.eq.s32.totalorder %v26, 14
    %vm57 = vcmp.eq.s32.totalorder %v27, 14
    %vm58 = vcmp.eq.s32.totalorder %v26, 15
    %vm59 = vcmp.eq.s32.totalorder %v27, 15
    %vm60 = vcmp.eq.s32.totalorder %v26, 16
    %vm61 = vcmp.eq.s32.totalorder %v27, 16
    %vm62 = vcmp.eq.s32.totalorder %v26, 17
    %vm63 = vcmp.eq.s32.totalorder %v27, 17
    %vm64 = vcmp.eq.s32.totalorder %v26, 18
    %vm65 = vcmp.eq.s32.totalorder %v27, 18
    %vm66 = vcmp.eq.s32.totalorder %v26, 19
    %vm67 = vcmp.eq.s32.totalorder %v27, 19
    %vm68 = vcmp.eq.s32.totalorder %v26, 20
    %vm69 = vcmp.eq.s32.totalorder %v27, 20
    %vm70 = vcmp.eq.s32.totalorder %v26, 21
    %vm71 = vcmp.eq.s32.totalorder %v27, 21
    %vm72 = vcmp.eq.s32.totalorder %v26, 22
    %vm73 = vcmp.eq.s32.totalorder %v27, 22
    %v74 = vsel %vm28, 1, 0
    %v75 = vsel %vm29, 1, 0
    %v76 = vsel %vm30, 1, 0
    %v77 = vsel %vm31, 1, 0
    %v78 = vsel %vm32, 1, 0
    %v79 = vsel %vm33, 1, 0
    %v80 = vsel %vm34, 1, 0
    %v81 = vsel %vm35, 1, 0
    %v82 = vsel %vm36, 1, 0
    %v83 = vsel %vm37, 1, 0
    %v84 = vsel %vm38, 1, 0
    %v85 = vsel %vm39, 1, 0
    %v86 = vsel %vm40, 1, 0
    %v87 = vsel %vm41, 1, 0
    %v88 = vsel %vm42, 1, 0
    %v89 = vsel %vm43, 1, 0
    %v90 = vsel %vm44, 1, 0
    %v91 = vsel %vm45, 1, 0
    %v92 = vsel %vm46, 1, 0
    %v93 = vsel %vm47, 1, 0
    %v94 = vsel %vm48, 1, 0
    %v95 = vsel %vm49, 1, 0
    %v96 = vsel %vm50, 1, 0
    %v97 = vsel %vm51, 1, 0
    %v98 = vsel %vm52, 1, 0
    %v99 = vsel %vm53, 1, 0
    %v100 = vsel %vm54, 1, 0
    %v101 = vsel %vm55, 1, 0
    %v102 = vsel %vm56, 1, 0
    %v103 = vsel %vm57, 1, 0
    %v104 = vsel %vm58, 1, 0
    %v105 = vsel %vm59, 1, 0
    %v106 = vsel %vm60, 1, 0
    %v107 = vsel %vm61, 1, 0
    %v108 = vsel %vm62, 1, 0
    %v109 = vsel %vm63, 1, 0
    %v110 = vsel %vm64, 1, 0
    %v111 = vsel %vm65, 1, 0
    %v112 = vsel %vm66, 1, 0
    %v113 = vsel %vm67, 1, 0
    %v114 = vsel %vm68, 1, 0
    %v115 = vsel %vm69, 1, 0
    %v116 = vsel %vm70, 1, 0
    %v117 = vsel %vm71, 1, 0
    %v118 = vsel %vm72, 1, 0
    %v119 = vsel %vm73, 1, 0
    %v120 = vcvt.s32.f32 %v74
    %v121 = vcvt.s32.f32 %v75
    %v122 = vcvt.s32.f32 %v76
    %v123 = vcvt.s32.f32 %v77
    %v124 = vcvt.s32.f32 %v78
    %v125 = vcvt.s32.f32 %v79
    %v126 = vcvt.s32.f32 %v80
    %v127 = vcvt.s32.f32 %v81
    %v128 = vcvt.s32.f32 %v82
    %v129 = vcvt.s32.f32 %v83
    %v130 = vcvt.s32.f32 %v84
    %v131 = vcvt.s32.f32 %v85
    %v132 = vcvt.s32.f32 %v86
    %v133 = vcvt.s32.f32 %v87
    %v134 = vcvt.s32.f32 %v88
    %v135 = vcvt.s32.f32 %v89
    %v136 = vcvt.s32.f32 %v90
    %v137 = vcvt.s32.f32 %v91
    %v138 = vcvt.s32.f32 %v92
    %v139 = vcvt.s32.f32 %v93
    %v140 = vcvt.s32.f32 %v94
    %v141 = vcvt.s32.f32 %v95
    %v142 = vcvt.s32.f32 %v96
    %v143 = vcvt.s32.f32 %v97
    %v144 = vcvt.s32.f32 %v98
    %v145 = vcvt.s32.f32 %v99
    %v146 = vcvt.s32.f32 %v100
    %v147 = vcvt.s32.f32 %v101
    %v148 = vcvt.s32.f32 %v102
    %v149 = vcvt.s32.f32 %v103
    %v150 = vcvt.s32.f32 %v104
    %v151 = vcvt.s32.f32 %v105
    %v152 = vcvt.s32.f32 %v106
    %v153 = vcvt.s32.f32 %v107
    %v154 = vcvt.s32.f32 %v108
    %v155 = vcvt.s32.f32 %v109
    %v156 = vcvt.s32.f32 %v110
    %v157 = vcvt.s32.f32 %v111
    %v158 = vcvt.s32.f32 %v112
    %v159 = vcvt.s32.f32 %v113
    %v160 = vcvt.s32.f32 %v114
    %v161 = vcvt.s32.f32 %v115
    %v162 = vcvt.s32.f32 %v116
    %v163 = vcvt.s32.f32 %v117
    %v164 = vcvt.s32.f32 %v118
    %v165 = vcvt.s32.f32 %v119
    %vm166 = vcmask 130048
    %167 = vst.msk [vmem:[%s1] sm:$0xff] %vm166, %v120
    %168 = vst.msk [vmem:[%s1 + $0x8] sm:$0xff] %vm166, %v121
    %169 = vst.msk [vmem:[%s1 + $0x10] sm:$0xff] %vm166, %v122
    %170 = vst.msk [vmem:[%s1 + $0x18] sm:$0xff] %vm166, %v123
    %171 = vst.msk [vmem:[%s1 + $0x20] sm:$0xff] %vm166, %v124
    %172 = vst.msk [vmem:[%s1 + $0x28] sm:$0xff] %vm166, %v125
    %173 = vst.msk [vmem:[%s1 + $0x30] sm:$0xff] %vm166, %v126
    %174 = vst.msk [vmem:[%s1 + $0x38] sm:$0xff] %vm166, %v127
    %175 = vst.msk [vmem:[%s1 + $0x40] sm:$0xff] %vm166, %v128
    %176 = vst.msk [vmem:[%s1 + $0x48] sm:$0xff] %vm166, %v129
    %177 = vst.msk [vmem:[%s1 + $0x50] sm:$0xff] %vm166, %v130
    %178 = vst.msk [vmem:[%s1 + $0x58] sm:$0xff] %vm166, %v131
    %179 = vst.msk [vmem:[%s1 + $0x60] sm:$0xff] %vm166, %v132
    %180 = vst.msk [vmem:[%s1 + $0x68] sm:$0xff] %vm166, %v133
    %181 = vst.msk [vmem:[%s1 + $0x70] sm:$0xff] %vm166, %v134
    %182 = vst.msk [vmem:[%s1 + $0x78] sm:$0xff] %vm166, %v135
    %183 = vst.msk [vmem:[%s1 + $0x80] sm:$0xff] %vm166, %v136
    %184 = vst.msk [vmem:[%s1 + $0x88] sm:$0xff] %vm166, %v137
    %185 = vst.msk [vmem:[%s1 + $0x90] sm:$0xff] %vm166, %v138
    %186 = vst.msk [vmem:[%s1 + $0x98] sm:$0xff] %vm166, %v139
    %187 = vst.msk [vmem:[%s1 + $0xa0] sm:$0xff] %vm166, %v140
    %188 = vst.msk [vmem:[%s1 + $0xa8] sm:$0xff] %vm166, %v141
    %189 = vst.msk [vmem:[%s1 + $0xb0] sm:$0xff] %vm166, %v142
    %190 = vst.msk [vmem:[%s1 + $0xb8] sm:$0xff] %vm166, %v143
    %191 = vst.msk [vmem:[%s1 + $0xc0] sm:$0xff] %vm166, %v144
    %192 = vst.msk [vmem:[%s1 + $0xc8] sm:$0xff] %vm166, %v145
    %193 = vst.msk [vmem:[%s1 + $0xd0] sm:$0xff] %vm166, %v146
    %194 = vst.msk [vmem:[%s1 + $0xd8] sm:$0xff] %vm166, %v147
    %195 = vst.msk [vmem:[%s1 + $0xe0] sm:$0xff] %vm166, %v148
    %196 = vst.msk [vmem:[%s1 + $0xe8] sm:$0xff] %vm166, %v149
    %197 = vst.msk [vmem:[%s1 + $0xf0] sm:$0xff] %vm166, %v150
    %198 = vst.msk [vmem:[%s1 + $0xf8] sm:$0xff] %vm166, %v151
    %199 = vst.msk [vmem:[%s1 + $0x100] sm:$0xff] %vm166, %v152
    %200 = vst.msk [vmem:[%s1 + $0x108] sm:$0xff] %vm166, %v153
    %201 = vst.msk [vmem:[%s1 + $0x110] sm:$0xff] %vm166, %v154
    %202 = vst.msk [vmem:[%s1 + $0x118] sm:$0xff] %vm166, %v155
    %203 = vst.msk [vmem:[%s1 + $0x120] sm:$0xff] %vm166, %v156
    %204 = vst.msk [vmem:[%s1 + $0x128] sm:$0xff] %vm166, %v157
    %205 = vst.msk [vmem:[%s1 + $0x130] sm:$0xff] %vm166, %v158
    %206 = vst.msk [vmem:[%s1 + $0x138] sm:$0xff] %vm166, %v159
    %207 = vst.msk [vmem:[%s1 + $0x140] sm:$0xff] %vm166, %v160
    %208 = vst.msk [vmem:[%s1 + $0x148] sm:$0xff] %vm166, %v161
    %209 = vst.msk [vmem:[%s1 + $0x150] sm:$0xff] %vm166, %v162
    %210 = vst.msk [vmem:[%s1 + $0x158] sm:$0xff] %vm166, %v163
    %211 = vst.msk [vmem:[%s1 + $0x160] sm:$0xff] %vm166, %v164
    %212 = vst.msk [vmem:[%s1 + $0x168] sm:$0xff] %vm166, %v165
    // Predicated region
    $region10: #{tpu_custom_call.1} parent=1 // pred_check
      _
    $region11: #{tpu_custom_call.1} parent=1 // pred_check_branch
      %214 = sbr.rel (0) target = $region13
    $region12: #{tpu_custom_call.1} parent=1 // pred_region
      _
    $region13: #{tpu_custom_call.1} parent=1 // pred_fallthru
      _
    // Predicated region
    $region14: #{tpu_custom_call.1} parent=1 // pred_check
      _
    $region15: #{tpu_custom_call.1} parent=1 // pred_check_branch
      %216 = sbr.rel (0) target = $region17
    $region16: #{tpu_custom_call.1} parent=1 // pred_region
      _
    $region17: #{tpu_custom_call.1} parent=1 // pred_fallthru
      _
    %217 = vsyncpa [#allocation3], 1

</llo_original>
